<compile_context>
chip_gen: v6e
topology: v6e:2x2x1
jax: 0.10.0
libtpu: 0.0.40
codegen_flags: <defaults>
</compile_context>

<pallas_src>
import functools

import jax
import jax.numpy as jnp
from jax import lax
from jax.experimental import pallas as pl
from jax.experimental.pallas import tpu as pltpu


def _round_up(x: int, m: int) -> int:
    return (x + m - 1) // m * m


def _min_sublane_rows(dtype) -> int:
    # f32 -> 8, bf16 -> 16, int8/fp8 -> 32 sublane granularity.
    return max(8, 32 // jnp.dtype(dtype).itemsize)


def _vmem_table_budget() -> int:
    """Per-generation byte budget for keeping the fused table VMEM-resident."""
    cap = None
    try:
        info = pltpu.get_tpu_info()
        cap = getattr(info, "vmem_capacity_bytes", None)
    except Exception:
        cap = None
    if not cap:
        cap = 64 << 20          # conservative: v7x physical VMEM
    return cap // 8             # headroom for the double-buffered output block


def build_fused_table(weight, prompt_embedding_table):
    """Concatenate [vocab ; prompt] tables. Build once and cache across calls."""
    assert weight.ndim == 2 and prompt_embedding_table.ndim == 2
    assert weight.shape[1] == prompt_embedding_table.shape[1], (
        "weight and prompt_embedding_table must share the hidden dimension")
    assert weight.dtype == prompt_embedding_table.dtype, (
        "weight and prompt_embedding_table must share a dtype")
    fused = jnp.concatenate([weight, prompt_embedding_table], axis=0)
    pad = _round_up(fused.shape[0], _min_sublane_rows(fused.dtype)) - fused.shape[0]
    if pad:
        fused = jnp.concatenate(
            [fused, jnp.zeros((pad, fused.shape[1]), fused.dtype)], axis=0)
    return fused


# --------------------------------------------------------------------------- #
# Kernels
# --------------------------------------------------------------------------- #
def _dma_gather_kernel(idx_ref, table_hbm, out_ref, sem, *, tile, nslot, unroll):
    """Per-row DMA gather from the fused HBM table; `nslot` copies in flight."""
    base = pl.program_id(0) * tile
    mask = nslot - 1            # nslot is a power of two

    def start_row(r, idx):
        pltpu.make_async_copy(table_hbm.at[idx], out_ref.at[r],
                              sem.at[r & mask]).start()

    def wait_row(r):
        # Wait byte-count depends only on shape/dtype; every row of the fused
        # table is identical, so a dummy source index is fine.
        pltpu.make_async_copy(table_hbm.at[0], out_ref.at[r],
                              sem.at[r & mask]).wait()

    # Prime the semaphore ring with the first `nslot` rows.
    def prime(r, c):
        start_row(r, idx_ref[base + r])
        return c

    lax.fori_loop(0, nslot, prime, 0, unroll=True)

    # Steady state.  The SMEM index read is hoisted ABOVE the semaphore wait so
    # the wait never sits on the critical path of the next row's address math.
    def steady(r, c):
        idx = idx_ref[base + r]          # scalar read before .wait()
        wait_row(r - nslot)              # recycle the slot this row will use
        start_row(r, idx)
        return c

    lax.fori_loop(nslot, tile, steady, 0, unroll=unroll)

    # Drain the last `nslot` in-flight copies before the block is written back.
    def drain(r, c):
        wait_row(r)
        return c

    lax.fori_loop(tile - nslot, tile, drain, 0, unroll=True)


def _vmem_gather_kernel(idx_ref, table_ref, out_ref, *, tile, unroll):
    """Small-table fast path: fused table is VMEM-resident; gather rows with
    dynamic in-VMEM row loads (no DMAs, no semaphores)."""
    base = pl.program_id(0) * tile

    def body(r, c):
        idx = idx_ref[base + r]
        out_ref[pl.ds(r, 1), :] = table_ref[pl.ds(idx, 1), :]
        return c

    lax.fori_loop(0, tile, body, 0, unroll=unroll)


# --------------------------------------------------------------------------- #
# Wrapper
# --------------------------------------------------------------------------- #
def prompt_tuning_embedding(tokens, prompt_embedding_table, tasks,
                            task_vocab_size, weight, *, vocab_size,
                            fused_table=None, tile_bs: int = 512,
                            max_inflight: int = 64, unroll: int = 8,
                            gather_mode: str = "auto"):
    """Forward pass of PromptTuningEmbedding (tp_size == 1).

    `fused_table` should be built once with build_fused_table() and cached by
    the caller; if omitted it is rebuilt here (avoid doing that per call).
    """
    if fused_table is None:
        fused_table = build_fused_table(weight, prompt_embedding_table)

    num_vocab_rows, h = weight.shape
    num_prompt_rows = prompt_embedding_table.shape[0]
    assert prompt_embedding_table.shape[1] == h
    assert fused_table.shape[1] == h
    assert fused_table.shape[0] >= num_vocab_rows + num_prompt_rows
    assert fused_table.dtype == weight.dtype

    b, s = tokens.shape
    bs = b * s
    itemsize = jnp.dtype(weight.dtype).itemsize
    min_rows = _min_sublane_rows(weight.dtype)
    row_bytes = h * itemsize

    # Row tile: big enough to amortize per-step overhead and the drain bubble,
    # dtype-aware sublane rounding, capped so (a) a block stays well inside
    # VMEM and (b) the grid has >= 2 steps when there is enough work (v7x).
    cap_rows = max(min_rows, ((8 << 20) // row_bytes) // min_rows * min_rows)
    half_rows = _round_up(max(1, bs // 2), min_rows)
    tile = max(min_rows, min(tile_bs, cap_rows, half_rows))
    bs_pad = _round_up(bs, tile)
    grid = bs_pad // tile

    # Fused row index per output row (tiny int math, done once in the wrapper
    # so the in-kernel issue path is one SMEM read + one gather per row).
    tokens_f = tokens.reshape(bs).astype(jnp.int32)
    tasks_f = tasks.reshape(bs).astype(jnp.int32)
    tvs = task_vocab_size.reshape(-1)[0].astype(jnp.int32)
    is_prompt = tokens_f > (vocab_size - 1)
    normal_idx = jnp.clip(tokens_f, 0, num_vocab_rows - 1)
    prompt_off = jnp.where(is_prompt, tokens_f - vocab_size, 0) + tasks_f * tvs
    prompt_idx = num_vocab_rows + jnp.clip(prompt_off, 0, num_prompt_rows - 1)
    fused_idx = jnp.where(is_prompt, prompt_idx, normal_idx).astype(jnp.int32)
    fused_idx = jnp.zeros((bs_pad,), jnp.int32).at[:bs].set(fused_idx)

    table_bytes = fused_table.shape[0] * row_bytes
    if gather_mode == "auto":
        gather_mode = "vmem" if table_bytes <= _vmem_table_budget() else "dma"

    out_bytes = bs_pad * row_bytes
    cost = pl.CostEstimate(flops=0, transcendentals=0,
                           bytes_accessed=2 * out_bytes + bs_pad * 4)
    out_shape = jax.ShapeDtypeStruct((bs_pad, h), weight.dtype)
    out_block = pl.BlockSpec((tile, h), lambda i, idx: (i, 0))

    if gather_mode == "vmem":
        kernel = functools.partial(_vmem_gather_kernel, tile=tile, unroll=unroll)
        vmem_limit = max(32 << 20,
                         2 * tile * row_bytes + 2 * table_bytes + (2 << 20))
        out = pl.pallas_call(
            kernel,
            out_shape=out_shape,
            grid_spec=pltpu.PrefetchScalarGridSpec(
                num_scalar_prefetch=1,
                grid=(grid,),
                in_specs=[pl.BlockSpec((fused_table.shape[0], h),
                                       lambda i, idx: (0, 0))],  # resident
                out_specs=out_block,
            ),
            compiler_params=pltpu.CompilerParams(
                dimension_semantics=("parallel",),
                vmem_limit_bytes=int(vmem_limit)),
            cost_estimate=cost,
        )(fused_idx, fused_table)
    else:
        nslot = min(max_inflight, tile)
        nslot = 1 << (nslot.bit_length() - 1)        # power of two, <= tile
        kernel = functools.partial(_dma_gather_kernel, tile=tile, nslot=nslot,
                                   unroll=unroll)
        vmem_limit = max(32 << 20, 2 * tile * row_bytes + (2 << 20))
        out = pl.pallas_call(
            kernel,
            out_shape=out_shape,
            grid_spec=pltpu.PrefetchScalarGridSpec(
                num_scalar_prefetch=1,
                grid=(grid,),
                in_specs=[pl.BlockSpec(memory_space=pl.ANY)],    # table in HBM
                out_specs=out_block,
                scratch_shapes=[pltpu.SemaphoreType.DMA((nslot,))],
            ),
            compiler_params=pltpu.CompilerParams(
                dimension_semantics=("parallel",),
                vmem_limit_bytes=int(vmem_limit)),
            cost_estimate=cost,
        )(fused_idx, fused_table)

    return out[:bs].reshape(b, s, h)


# --------------------------------------------------------------------------- #
# Pure-JAX reference (mirrors the PyTorch module)
# --------------------------------------------------------------------------- #
def _reference(tokens, prompt_embedding_table, tasks, task_vocab_size,
               weight, *, vocab_size):
    mask = tokens > (vocab_size - 1)
    normal_tokens = jnp.where(mask, vocab_size - 1, tokens)
    normal_emb = jnp.take(weight, normal_tokens, axis=0)
    prompt_tokens = (jnp.where(mask, tokens - vocab_size, 0)
                     + tasks * task_vocab_size[0])
    prompt_emb = jnp.take(prompt_embedding_table, prompt_tokens, axis=0)
    return jnp.where(mask[..., None], prompt_emb, normal_emb)


if __name__ == "__main__":
    # Small deterministic setup (lane-dense hidden size).
    vocab_size = 64
    num_embeddings = vocab_size          # no TP
    embedding_dim = 128                  # hidden size
    batch, seq = 2, 8
    num_tasks = 3
    tokens_per_task = 8                  # task_vocab_size

    key = jax.random.PRNGKey(0)
    k_w, k_p, k_tok, k_task = jax.random.split(key, 4)

    weight = jax.random.normal(k_w, (num_embeddings, embedding_dim), jnp.float32)
    prompt_embedding_table = jax.random.normal(
        k_p, (num_tasks * tokens_per_task, embedding_dim), jnp.float32)

    # Token ids in [0, vocab_size + tokens_per_task): some are prompt-tuned.
    tokens = jax.random.randint(
        k_tok, (batch, seq), 0, vocab_size + tokens_per_task, jnp.int32)
    tasks = jax.random.randint(k_task, (batch, seq), 0, num_tasks, jnp.int32)
    task_vocab_size = jnp.array([tokens_per_task], jnp.int32)

    # Build the fused [vocab ; prompt] table once (cache across calls).
    fused = build_fused_table(weight, prompt_embedding_table)

    ref = _reference(tokens, prompt_embedding_table, tasks, task_vocab_size,
                     weight, vocab_size=vocab_size)

    # Exercise BOTH gather paths (auto -> VMEM-resident fast path here, plus
    # the forced per-row DMA gather used for large production tables).
    for mode in ("auto", "dma"):
        out = prompt_tuning_embedding(
            tokens, prompt_embedding_table, tasks, task_vocab_size, weight,
            vocab_size=vocab_size, fused_table=fused, gather_mode=mode)
        out = jax.block_until_ready(out)
        assert out.shape == (batch, seq, embedding_dim)
        assert jnp.array_equal(out, ref), f"mismatch vs reference (mode={mode})"

    print("KERNEL_OK")
</pallas_src>

<mosaic_0001>
module attributes {stable_mosaic.version = 11 : i64} {
  func.func @_vmem_gather_kernel(%arg0: i32, %arg1: memref<16xi32, #tpu.memory_space<smem>>, %arg2: memref<88x128xf32, #tpu.memory_space<vmem>>, %arg3: memref<8x128xf32, #tpu.memory_space<vmem>>) attributes {dimension_semantics = [#tpu.dimension_semantics<parallel>], iteration_bounds = array<i64: 2>, scalar_prefetch = 1 : i64, scratch_operands = 0 : i64, tpu.core_type = #tpu.core_type<tc>, window_params = [{pipeline_mode = #tpu.pipeline_mode<synchronous>, transform_indices = @transform_0, window_bounds = array<i64: 88, 128>}, {transform_indices = @transform_1, window_bounds = array<i64: 8, 128>}]} {
    %c8_i32 = arith.constant 8 : i32
    %0 = arith.muli %arg0, %c8_i32 : i32
    %c0_i32 = arith.constant 0 : i32
    %1 = arith.addi %0, %c0_i32 : i32
    %2 = arith.index_cast %1 : i32 to index
    %3 = memref.load %arg1[%2] : memref<16xi32, #tpu.memory_space<smem>>
    %4 = arith.index_cast %3 : i32 to index
    %c0 = arith.constant 0 : index
    %5 = vector.load %arg2[%4, %c0] : memref<88x128xf32, #tpu.memory_space<vmem>>, vector<1x128xf32>
    %6 = arith.index_cast %c0_i32 : i32 to index
    %c0_0 = arith.constant 0 : index
    %7 = vector.load %arg3[%6, %c0_0] : memref<8x128xf32, #tpu.memory_space<vmem>>, vector<1x128xf32>
    tpu.vector_store %arg3[%6, %c0_0], %5 {strides = array<i32>} : memref<8x128xf32, #tpu.memory_space<vmem>>, vector<1x128xf32>,
    %c1_i32 = arith.constant 1 : i32
    %8 = arith.addi %0, %c1_i32 : i32
    %9 = arith.index_cast %8 : i32 to index
    %10 = memref.load %arg1[%9] : memref<16xi32, #tpu.memory_space<smem>>
    %11 = arith.index_cast %10 : i32 to index
    %c0_1 = arith.constant 0 : index
    %12 = vector.load %arg2[%11, %c0_1] : memref<88x128xf32, #tpu.memory_space<vmem>>, vector<1x128xf32>
    %13 = arith.index_cast %c1_i32 : i32 to index
    %c0_2 = arith.constant 0 : index
    %14 = vector.load %arg3[%13, %c0_2] : memref<8x128xf32, #tpu.memory_space<vmem>>, vector<1x128xf32>
    tpu.vector_store %arg3[%13, %c0_2], %12 {strides = array<i32>} : memref<8x128xf32, #tpu.memory_space<vmem>>, vector<1x128xf32>,
    %c2_i32 = arith.constant 2 : i32
    %15 = arith.addi %0, %c2_i32 : i32
    %16 = arith.index_cast %15 : i32 to index
    %17 = memref.load %arg1[%16] : memref<16xi32, #tpu.memory_space<smem>>
    %18 = arith.index_cast %17 : i32 to index
    %c0_3 = arith.constant 0 : index
    %19 = vector.load %arg2[%18, %c0_3] : memref<88x128xf32, #tpu.memory_space<vmem>>, vector<1x128xf32>
    %20 = arith.index_cast %c2_i32 : i32 to index
    %c0_4 = arith.constant 0 : index
    %21 = vector.load %arg3[%20, %c0_4] : memref<8x128xf32, #tpu.memory_space<vmem>>, vector<1x128xf32>
    tpu.vector_store %arg3[%20, %c0_4], %19 {strides = array<i32>} : memref<8x128xf32, #tpu.memory_space<vmem>>, vector<1x128xf32>,
    %c3_i32 = arith.constant 3 : i32
    %22 = arith.addi %0, %c3_i32 : i32
    %23 = arith.index_cast %22 : i32 to index
    %24 = memref.load %arg1[%23] : memref<16xi32, #tpu.memory_space<smem>>
    %25 = arith.index_cast %24 : i32 to index
    %c0_5 = arith.constant 0 : index
    %26 = vector.load %arg2[%25, %c0_5] : memref<88x128xf32, #tpu.memory_space<vmem>>, vector<1x128xf32>
    %27 = arith.index_cast %c3_i32 : i32 to index
    %c0_6 = arith.constant 0 : index
    %28 = vector.load %arg3[%27, %c0_6] : memref<8x128xf32, #tpu.memory_space<vmem>>, vector<1x128xf32>
    tpu.vector_store %arg3[%27, %c0_6], %26 {strides = array<i32>} : memref<8x128xf32, #tpu.memory_space<vmem>>, vector<1x128xf32>,
    %c4_i32 = arith.constant 4 : i32
    %29 = arith.addi %0, %c4_i32 : i32
    %30 = arith.index_cast %29 : i32 to index
    %31 = memref.load %arg1[%30] : memref<16xi32, #tpu.memory_space<smem>>
    %32 = arith.index_cast %31 : i32 to index
    %c0_7 = arith.constant 0 : index
    %33 = vector.load %arg2[%32, %c0_7] : memref<88x128xf32, #tpu.memory_space<vmem>>, vector<1x128xf32>
    %34 = arith.index_cast %c4_i32 : i32 to index
    %c0_8 = arith.constant 0 : index
    %35 = vector.load %arg3[%34, %c0_8] : memref<8x128xf32, #tpu.memory_space<vmem>>, vector<1x128xf32>
    tpu.vector_store %arg3[%34, %c0_8], %33 {strides = array<i32>} : memref<8x128xf32, #tpu.memory_space<vmem>>, vector<1x128xf32>,
    %c5_i32 = arith.constant 5 : i32
    %36 = arith.addi %0, %c5_i32 : i32
    %37 = arith.index_cast %36 : i32 to index
    %38 = memref.load %arg1[%37] : memref<16xi32, #tpu.memory_space<smem>>
    %39 = arith.index_cast %38 : i32 to index
    %c0_9 = arith.constant 0 : index
    %40 = vector.load %arg2[%39, %c0_9] : memref<88x128xf32, #tpu.memory_space<vmem>>, vector<1x128xf32>
    %41 = arith.index_cast %c5_i32 : i32 to index
    %c0_10 = arith.constant 0 : index
    %42 = vector.load %arg3[%41, %c0_10] : memref<8x128xf32, #tpu.memory_space<vmem>>, vector<1x128xf32>
    tpu.vector_store %arg3[%41, %c0_10], %40 {strides = array<i32>} : memref<8x128xf32, #tpu.memory_space<vmem>>, vector<1x128xf32>,
    %c6_i32 = arith.constant 6 : i32
    %43 = arith.addi %0, %c6_i32 : i32
    %44 = arith.index_cast %43 : i32 to index
    %45 = memref.load %arg1[%44] : memref<16xi32, #tpu.memory_space<smem>>
    %46 = arith.index_cast %45 : i32 to index
    %c0_11 = arith.constant 0 : index
    %47 = vector.load %arg2[%46, %c0_11] : memref<88x128xf32, #tpu.memory_space<vmem>>, vector<1x128xf32>
    %48 = arith.index_cast %c6_i32 : i32 to index
    %c0_12 = arith.constant 0 : index
    %49 = vector.load %arg3[%48, %c0_12] : memref<8x128xf32, #tpu.memory_space<vmem>>, vector<1x128xf32>
    tpu.vector_store %arg3[%48, %c0_12], %47 {strides = array<i32>} : memref<8x128xf32, #tpu.memory_space<vmem>>, vector<1x128xf32>,
    %c7_i32 = arith.constant 7 : i32
    %50 = arith.addi %0, %c7_i32 : i32
    %51 = arith.index_cast %50 : i32 to index
    %52 = memref.load %arg1[%51] : memref<16xi32, #tpu.memory_space<smem>>
    %53 = arith.index_cast %52 : i32 to index
    %c0_13 = arith.constant 0 : index
    %54 = vector.load %arg2[%53, %c0_13] : memref<88x128xf32, #tpu.memory_space<vmem>>, vector<1x128xf32>
    %55 = arith.index_cast %c7_i32 : i32 to index
    %c0_14 = arith.constant 0 : index
    %56 = vector.load %arg3[%55, %c0_14] : memref<8x128xf32, #tpu.memory_space<vmem>>, vector<1x128xf32>
    tpu.vector_store %arg3[%55, %c0_14], %54 {strides = array<i32>} : memref<8x128xf32, #tpu.memory_space<vmem>>, vector<1x128xf32>,
    %c8_i32_15 = arith.constant 8 : i32
    return
  }
  func.func @transform_0(%arg0: i32, %arg1: memref<16xi32, #tpu.memory_space<smem>>) -> (i32, i32) {
    %c0_i32 = arith.constant 0 : i32
    %c0_i32_0 = arith.constant 0 : i32
    %c0_i32_1 = arith.constant 0 : i32
    return %c0_i32, %c0_i32_0 : i32, i32
  }
  func.func @transform_1(%arg0: i32, %arg1: memref<16xi32, #tpu.memory_space<smem>>) -> (i32, i32) {
    %c0_i32 = arith.constant 0 : i32
    %c0_i32_0 = arith.constant 0 : i32
    return %arg0, %c0_i32 : i32, i32
  }
}

</mosaic_0001>

<llo_original>
// kernel: tpu_custom_call.1
$region0: #{tpu_custom_call.1}
  #allocation0 [shape = 'u32[]', space=smem, size = 0x4, offset = 0x4, fixed_abs, tag = 'smem constant byte address 0x4 - core index']
  #allocation1 [shape = 'u32[144,128]{1,0:T(1,128)}', space=vmem, size = 0x12000, scoped, tag = 'internal scratch']
  #allocation2 [shape = 's32[1]{0}', space=sflag, size = 0x4, scoped, tag = 'scoped memory for tpu_custom_call.1']
  #allocation3 [shape = 'u8[512]{0}', space=smem, size = 0x200, scoped, tag = 'prefetched SMEM operand 0']
  %s0 = inlined_call_operand.hbm [shape: s32[16], index: 0, kind: input, shape index: {}]
  %s1 = inlined_call_operand.hbm [shape: f32[88,128], index: 1, kind: input, shape index: {}]
  %s2 = inlined_call_operand.hbm [shape: f32[16,128], index: 2, kind: output, shape index: {}]
  %s3 = sld [smem:[#allocation0]]
  $region41: #{tpu_custom_call.1} parent=0
    _
  %s5 = ssub.s32 1, %s3
  %s6 = scalar_select 0, %s5, %s3
  %8 = dma.hbm_to_smem %s0, 16, [#allocation3], [#allocation2]
  %9 = dma.done [#allocation2], 16
  %10 = sfence
  $region1: #{tpu_custom_call.1} parent=0
    #allocation4 [shape = 'u8[45056]{0}', space=vmem, size = 0xb000, scoped, tag = 'input window, operand 1, single buffered']
    #allocation5 [shape = 's32[2]{0}', space=sflag, size = 0x8, scoped, tag = 'scoped memory for tpu_custom_call.1']
    #allocation6 [shape = 's32[2]{0}', space=sflag, size = 0x8, scoped, tag = 'scoped memory for tpu_custom_call.1']
    #allocation7 [shape = 'u8[8192]{0}', space=vmem, size = 0x2000, scoped, tag = 'output window, operand 0']
    %11 = vsyncpa [#allocation5], 0
    %12 = vsyncpa [#allocation6], 0
    %s13 = scalar_lea.sflag [#allocation6], 1
    %14 = vsyncpa %s13, 0
    loop: start=0, step=1, limit=4
    $region2: #{tpu_custom_call.1} parent=1 // loop_pre_header
      _
    $region3: #{tpu_custom_call.1} parent=1 // loop_header
      %s16 = sphi 0, %s20
      %p17 = scmp.ge.s32.totalorder %s16, 4
      %s24 = sphi 0, %s24
      %s26 = sphi 0, %s24
      %s27 = sphi 0, %s26
      %s41 = sphi 0, %s27
      %s47 = sphi 0, %s49
      %s50 = sphi 0, %s47
      %s51 = sphi 0, %s50
      %s67 = sphi 0, %s51
    $region4: #{tpu_custom_call.1} parent=1 // loop_header_branch
      %19 = sbr.rel (%p17) target = $region8
    $region5: #{tpu_custom_call.1} parent=1 // loop_body
      %s21 = ssub.s32 %s16, 1
      %s22 = ssub.s32 %s16, 2
      %s23 = sadd.s32 %s16, 1
      %s25 = sadd.s32 %s24, 1
      %p28 = scmp.eq.s32.totalorder %s16, 1
      %p29 = scmp.ne.s32.totalorder %s24, %s26
      %p30 = scmp.eq.s32.totalorder %s16, 0
      %p31 = por %p29, %p30
      %p32 = scmp.ne.s32.totalorder %s24, %s26
      %p33 = scmp.eq.s32.totalorder %s21, 1
      %p34 = por %p32, %p33
      %p35 = scmp.ne.s32.totalorder %s26, %s27
      %p36 = scmp.eq.s32.totalorder %s21, 0
      %p37 = por %p35, %p36
      %p38 = scmp.ne.s32.totalorder %s26, %s27
      %p39 = scmp.eq.s32.totalorder %s22, 1
      %p40 = por %p38, %p39
      %p42 = scmp.ne.s32.totalorder %s27, %s41
      %p43 = scmp.eq.s32.totalorder %s22, 0
      %p44 = por %p42, %p43
      %s45 = ssub.s32 %s16, %s23
      %p46 = scmp.eq.s32.totalorder %s45, 0
      %s48 = sadd.s32 %s47, 1
      %s49 = scalar_select %p46, %s47, %s48
      %p52 = pneg %p46
      %p53 = scmp.eq.s32.totalorder %s16, 1
      %p54 = por %p52, %p53
      %p55 = scmp.ne.s32.totalorder %s47, %s50
      %p56 = scmp.eq.s32.totalorder %s16, 0
      %p57 = por %p55, %p56
      %p58 = scmp.ne.s32.totalorder %s47, %s50
      %p59 = scmp.eq.s32.totalorder %s21, 1
      %p60 = por %p58, %p59
      %p61 = scmp.ne.s32.totalorder %s50, %s51
      %p62 = scmp.eq.s32.totalorder %s21, 0
      %p63 = por %p61, %p62
      %p64 = scmp.ne.s32.totalorder %s50, %s51
      %p65 = scmp.eq.s32.totalorder %s22, 1
      %p66 = por %p64, %p65
      %p68 = scmp.ne.s32.totalorder %s51, %s67
      %p69 = scmp.eq.s32.totalorder %s22, 0
      %p70 = por %p68, %p69
      %p71 = scmp.le.s32.totalorder 1, %s16
      %p72 = scmp.lt.s32.totalorder %s16, 3
      %p73 = pnand %p71, %p72
      %p74 = pneg %p73
      // Predicated region
      $region9: #{tpu_custom_call.1} parent=5 // pred_check
        _
      $region10: #{tpu_custom_call.1} parent=5 // pred_check_branch
        %76 = sbr.rel (%p73) target = $region12
      $region11: #{tpu_custom_call.1} parent=5 // pred_region
        %s77 = ssub.s32 %s16, 1
        // Predicated region
        $region13: #{tpu_custom_call.1} parent=11 // pred_check
          %p78 = pneg %p37
        $region14: #{tpu_custom_call.1} parent=11 // pred_check_branch
          %80 = sbr.rel (%p78) target = $region16
        $region15: #{tpu_custom_call.1} parent=11 // pred_region
          %s82 = ssub.s32 1408, 1408
          %83 = vsyncadd [#allocation5], %s82
          %s84 = sshll.u32 [#allocation4], 4
          %s85 = int_to_ptr.vmem [resolvable:$true] %s84
          %90 = dma.hbm_to_vmem [thread:$0]  %s1, 1408, %s85, [#allocation5], 128, 128, 8
        $region16: #{tpu_custom_call.1} parent=11 // pred_fallthru
          _
      $region12: #{tpu_custom_call.1} parent=5 // pred_fallthru
        _
      %p91 = scmp.lt.s32.totalorder %s16, 2
      // Predicated region
      $region17: #{tpu_custom_call.1} parent=5 // pred_check
        %p92 = pneg %p91
      $region18: #{tpu_custom_call.1} parent=5 // pred_check_branch
        %94 = sbr.rel (%p92) target = $region20
      $region19: #{tpu_custom_call.1} parent=5 // pred_region
        _
      $region20: #{tpu_custom_call.1} parent=5 // pred_fallthru
        _
      %p95 = scmp.le.s32.totalorder 1, %s16
      %p96 = scmp.lt.s32.totalorder %s16, 3
      %p97 = pnand %p95, %p96
      %p98 = pneg %p97
      // Predicated region
      $region21: #{tpu_custom_call.1} parent=5 // pred_check
        _
      $region22: #{tpu_custom_call.1} parent=5 // pred_check_branch
        %100 = sbr.rel (%p97) target = $region24
      $region23: #{tpu_custom_call.1} parent=5 // pred_region
        %s101 = ssub.s32 %s16, 1
        // Predicated region
        $region25: #{tpu_custom_call.1} parent=23 // pred_check
          %p102 = pneg %p37
        $region26: #{tpu_custom_call.1} parent=23 // pred_check_branch
          %104 = sbr.rel (%p102) target = $region28
        $region27: #{tpu_custom_call.1} parent=23 // pred_region
          %105 = dma.done [#allocation5], 1408
        $region28: #{tpu_custom_call.1} parent=23 // pred_fallthru
          _
        %p106 = pneg %p37
        %p107 = pneg %p34
        %p108 = pneg %p63
        %p109 = pneg %p60
        %s110 = sand.u32 %s50, 1
        %s111 = scalar_lea.sflag [#allocation6], %s110
        %s112 = sand.u32 %s50, 1
        %s113 = smul.addr %s112, 8
        %s114 = scalar_lea.vmem [#allocation7], %s113
        %s115 = smul.u32 %s21, 8
        %s116 = sld [smem:[#allocation3 + %s115]]
        %s117 = scalar_lea.vmem [#allocation4], %s116
        %v118 = vld [vmem:[%s117] sm:$0x1]
        %119 = vst [vmem:[%s114] sm:$0x1] %v118
        %s120 = sadd.s32 %s115, 1
        %s121 = sld [smem:[#allocation3 + %s120]]
        %s122 = scalar_lea.vmem [#allocation4], %s121
        %v123 = vld [vmem:[%s122] sm:$0x1]
        %124 = vst [vmem:[%s114 + $0x1] sm:$0x1] %v123
        %s125 = sadd.s32 %s115, 2
        %s126 = sld [smem:[#allocation3 + %s125]]
        %s127 = scalar_lea.vmem [#allocation4], %s126
        %v128 = vld [vmem:[%s127] sm:$0x1]
        %129 = vst [vmem:[%s114 + $0x2] sm:$0x1] %v128
        %s130 = sadd.s32 %s115, 3
        %s131 = sld [smem:[#allocation3 + %s130]]
        %s132 = scalar_lea.vmem [#allocation4], %s131
        %v133 = vld [vmem:[%s132] sm:$0x1]
        %134 = vst [vmem:[%s114 + $0x3] sm:$0x1] %v133
        %s135 = sadd.s32 %s115, 4
        %s136 = sld [smem:[#allocation3 + %s135]]
        %s137 = scalar_lea.vmem [#allocation4], %s136
        %v138 = vld [vmem:[%s137] sm:$0x1]
        %139 = vst [vmem:[%s114 + $0x4] sm:$0x1] %v138
        %s140 = sadd.s32 %s115, 5
        %s141 = sld [smem:[#allocation3 + %s140]]
        %s142 = scalar_lea.vmem [#allocation4], %s141
        %v143 = vld [vmem:[%s142] sm:$0x1]
        %144 = vst [vmem:[%s114 + $0x5] sm:$0x1] %v143
        %s145 = sadd.s32 %s115, 6
        %s146 = sld [smem:[#allocation3 + %s145]]
        %s147 = scalar_lea.vmem [#allocation4], %s146
        %v148 = vld [vmem:[%s147] sm:$0x1]
        %149 = vst [vmem:[%s114 + $0x6] sm:$0x1] %v148
        %s150 = sadd.s32 %s115, 7
        %s151 = sld [smem:[#allocation3 + %s150]]
        %s152 = scalar_lea.vmem [#allocation4], %s151
        %v153 = vld [vmem:[%s152] sm:$0x1]
        %154 = vst [vmem:[%s114 + $0x7] sm:$0x1] %v153
        %s155 = sand.u32 %s50, 1
        %s156 = scalar_lea.sflag [#allocation6], %s155
        %s157 = sand.u32 %s50, 1
        %s158 = smul.addr %s157, 8
        %s159 = scalar_lea.vmem [#allocation7], %s158
        // Predicated region
        $region29: #{tpu_custom_call.1} parent=23 // pred_check
          %p160 = pneg %p60
        $region30: #{tpu_custom_call.1} parent=23 // pred_check_branch
          %162 = sbr.rel (%p160) target = $region32
        $region31: #{tpu_custom_call.1} parent=23 // pred_region
          %s164 = ssub.s32 128, 128
          %165 = vsyncadd %s156, %s164
          %s166 = smul.addr %s21, 128
          %s167 = scalar_lea.hbm %s2, %s166
          %s169 = sshll.u32 %s159, 4
          %s170 = int_to_ptr.vmem [resolvable:$true] %s169
          %172 = dma.vmem_to_hbm [thread:$0]  %s170, 128, %s167, %s156
        $region32: #{tpu_custom_call.1} parent=23 // pred_fallthru
          _
      $region24: #{tpu_custom_call.1} parent=5 // pred_fallthru
        _
      %p173 = scmp.le.s32.totalorder 2, %s16
      // Predicated region
      $region33: #{tpu_custom_call.1} parent=5 // pred_check
        %p174 = pneg %p173
      $region34: #{tpu_custom_call.1} parent=5 // pred_check_branch
        %176 = sbr.rel (%p174) target = $region36
      $region35: #{tpu_custom_call.1} parent=5 // pred_region
        %s177 = ssub.s32 %s16, 2
        // Predicated region
        $region37: #{tpu_custom_call.1} parent=35 // pred_check
          %p178 = pneg %p66
        $region38: #{tpu_custom_call.1} parent=35 // pred_check_branch
          %180 = sbr.rel (%p178) target = $region40
        $region39: #{tpu_custom_call.1} parent=35 // pred_region
          %s181 = sand.u32 %s51, 1
          %s182 = scalar_lea.sflag [#allocation6], %s181
          %s183 = sand.u32 %s51, 1
          %s184 = smul.addr %s183, 8
          %s185 = scalar_lea.vmem [#allocation7], %s184
          %186 = dma.done %s182, 128
        $region40: #{tpu_custom_call.1} parent=35 // pred_fallthru
          _
      $region36: #{tpu_custom_call.1} parent=5 // pred_fallthru
        _
    $region6: #{tpu_custom_call.1} parent=1 // loop_footer
      %s20 = sadd.s32 1, %s16
    $region7: #{tpu_custom_call.1} parent=1 // loop_footer_branch
      %15 = sbr.rel target = $region3
    $region8: #{tpu_custom_call.1} parent=1 // loop_exit
      _
    %187 = vsyncpa [#allocation5], 1
    %s188 = scalar_lea.sflag [#allocation5], 1
    %189 = vsyncpa %s188, 1
    %190 = vsyncpa [#allocation6], 1
    %s191 = scalar_lea.sflag [#allocation6], 1
    %192 = vsyncpa %s191, 1

</llo_original>
